<compile_context>
chip_gen: v5e
topology: v5e:2x2
jax: 0.10.0
libtpu: 0.0.40
codegen_flags: <defaults>
</compile_context>

<pallas_src>
import jax
import jax.numpy as jnp
from jax.experimental import pallas as pl
from jax.experimental.pallas import tpu as pltpu


def _round_up(x, m):
    return (x + m - 1) // m * m


def _vocab_tiling(V, vocab_tile):
    TV = vocab_tile if V >= vocab_tile else _round_up(V, 128)
    V_pad = _round_up(V, TV)
    return TV, V_pad


# ----------------------------------------------------------------------------
# One-time weight preparation (fusion / folding / padding).  Call once, reuse
# across decode steps.
# ----------------------------------------------------------------------------
def prepare_params(params, *, vocab_tile=512):
    if "w_es" in params:          # already prepared
        return params
    f32 = jnp.float32
    E = params["word_emb"].shape[1]
    H = params["w_hh"].shape[0]
    V = params["w_cls"].shape[1]

    w_ih = params["w_ih"].astype(f32)            # [3E, 3H], rows: [embed|ctx|struct]
    w_ih_e = w_ih[:E]
    w_ih_c = w_ih[E:2 * E]
    w_ih_s = w_ih[2 * E:]

    # embed/struct halves fused; ctx_proj folded into the ctx half
    w_es = jnp.concatenate([w_ih_e, w_ih_s], axis=0)                     # [2E, 3H]
    w_ctx_ih = jnp.dot(params["w_ctx"].astype(f32), w_ih_c)              # [A, 3H]
    b_gi = jnp.dot(params["b_ctx"].astype(f32), w_ih_c)                  # [1, 3H]

    b_ih = params["b_ih"].astype(f32)
    b_hh = params["b_hh"].astype(f32)
    b_rz = b_ih[:, :2 * H] + b_hh[:, :2 * H] + b_gi[:, :2 * H]           # [1, 2H]
    b_in = b_ih[:, 2 * H:] + b_gi[:, 2 * H:]                             # [1, H]
    b_hn = b_hh[:, 2 * H:]                                               # [1, H]

    # all h0-dependent matmuls fused: columns = [q_proj | r | z | n]
    w_h0 = jnp.concatenate([params["w_attn_q"].astype(f32),
                            params["w_hh"].astype(f32)], axis=1)         # [H, S+3H]

    TV, V_pad = _vocab_tiling(V, vocab_tile)
    w_cls_pad = jnp.pad(params["w_cls"].astype(f32), ((0, 0), (0, V_pad - V)))
    b_cls_pad = jnp.pad(params["b_cls"].astype(f32), ((0, 0), (0, V_pad - V)))

    prepared = dict(params)
    prepared.update({
        "w_es": w_es, "w_ctx_ih": w_ctx_ih,
        "b_rz": b_rz, "b_in": b_in, "b_hn": b_hn,
        "w_h0": w_h0,
        "w_cls_pad": w_cls_pad, "b_cls_pad": b_cls_pad,
    })
    return prepared


# ----------------------------------------------------------------------------
# Pallas kernel: one decoder step; grid axis tiles the (padded) vocab dim.
# ----------------------------------------------------------------------------
def decoder_step_kernel(es_ref, h0_ref, henc_ref, kproj_ref, mask_ref,
                        wh0_ref, v_ref,
                        wes_ref, wctxih_ref, brz_ref, bin_ref, bhn_ref,
                        wcls_ref, bcls_ref,
                        packed_ref, logit_ref,
                        h1_scratch):
    f32 = jnp.float32
    j = pl.program_id(0)

    N, L, A = henc_ref.shape
    H = h0_ref.shape[1]
    S = kproj_ref.shape[2]

    # ---- attention + GRU: computed once (vocab tile 0), carried in scratch --
    @pl.when(j == 0)
    def _attention_and_gru():
        h0 = h0_ref[...].astype(f32)                                      # [N, H]

        # fused h0 matmul: output columns are [q_proj | gh_r | gh_z | gh_n]
        h0p = jnp.dot(h0, wh0_ref[...], preferred_element_type=f32)       # [N, S+3H]
        q_proj = h0p[:, :S]                                               # [N, S]
        gh = h0p[:, S:]                                                   # [N, 3H]

        # Bahdanau score: v . tanh(q + k); k_proj (incl. bias) precomputed
        attn = jnp.tanh(q_proj[:, None, :] + kproj_ref[...].astype(f32))  # [N, L, S]
        score = jnp.sum(attn * v_ref[...].reshape(1, 1, S), axis=-1)      # [N, L]
        # masked_fill(mask == 0, -1e10)
        score = jnp.where(mask_ref[...] > 0.0, score, f32(-1e10))

        # softmax over source positions (exact, to match torch.softmax)
        m = jnp.max(score, axis=-1, keepdims=True)
        e = jnp.exp(score - m)
        w = e / jnp.sum(e, axis=-1, keepdims=True)                        # [N, L]

        # context = weights @ h_enc
        # TODO(synk): for large L/A, switch to a batched MXU contraction
        # (jnp.einsum('nl,nla->na', ...)) to keep VPU/XLU slots free.
        henc = henc_ref[...].astype(f32)
        ctx = jnp.sum(w[:, :, None] * henc, axis=1)                       # [N, A]

        # GRU input pre-activations; ctx_proj already folded into wctxih/biases
        gi = (jnp.dot(es_ref[...].astype(f32), wes_ref[...],
                      preferred_element_type=f32)
              + jnp.dot(ctx, wctxih_ref[...], preferred_element_type=f32))  # [N, 3H]

        # GRU cell (single timestep), gate order [r, z, n] as in PyTorch
        rz = jax.nn.sigmoid(gi[:, :2 * H] + gh[:, :2 * H] + brz_ref[...])
        r = rz[:, :H]
        z = rz[:, H:]
        n = jnp.tanh(gi[:, 2 * H:] + bin_ref[...]
                     + r * (gh[:, 2 * H:] + bhn_ref[...]))
        h1 = (1.0 - z) * n + z * h0                                       # [N, H]

        h1_scratch[...] = h1

        # lane-dense packed output slab: [h1 | attn weights | zero pad]
        P = packed_ref.shape[1]
        pieces = [h1, w]
        if P > H + L:
            pieces.append(jnp.zeros((N, P - H - L), f32))
        packed_ref[...] = jnp.concatenate(pieces, axis=-1)

    # ---- classifier, tiled over the padded vocab axis ------------------------
    logit_ref[...] = (jnp.dot(h1_scratch[...], wcls_ref[...],
                              preferred_element_type=f32) + bcls_ref[...])


# ----------------------------------------------------------------------------
# Wrapper (plain-JAX glue + pallas_call)
# ----------------------------------------------------------------------------
def struct_bah_attn_decoder_forward(params, input_dict, *, vocab_tile=512):
    params = prepare_params(params, vocab_tile=vocab_tile)

    word = input_dict["word"]                  # [N, 1] int32
    attn_emb = input_dict["attn_emb"]          # [N, L, A]  (native dtype; bf16 ok)
    attn_emb_len = input_dict["attn_emb_len"]  # [N]
    structure = input_dict["structure"]        # [N] int32
    state = input_dict.get("state", None)
    # fc_emb is only a device carrier in the PyTorch forward; unused here.

    N, L, A = attn_emb.shape
    E = params["word_emb"].shape[1]
    H = params["w_hh"].shape[0]
    S = params["w_attn_q"].shape[1]
    V = params["w_cls"].shape[1]
    f32 = jnp.float32

    # Embedding gathers stay in plain XLA; word/struct embeddings concatenated
    # so the kernel's embedding matmul is a single MXU push.
    # TODO(synk): training-mode dropout on the word embedding is not modelled.
    embed = jnp.take(params["word_emb"], word[:, 0], axis=0).astype(f32)      # [N, E]
    struct_emb = jnp.take(params["struct_emb"], structure, axis=0).astype(f32)
    es = jnp.concatenate([embed, struct_emb], axis=-1)                        # [N, 2E]

    if state is None:
        state = jnp.zeros((1, N, H), f32)     # GRU, num_layers=1, unidirectional
    h0 = jnp.transpose(state, (1, 0, 2)).reshape(N, H).astype(f32)            # [N, H]

    # Hoisted encoder projection (constant across decode steps, attention bias
    # pre-folded). AR-loop callers should precompute it once and pass
    # input_dict["k_proj"].
    k_proj = input_dict.get("k_proj", None)
    if k_proj is None:
        k_proj = (jnp.einsum("nla,as->nls", attn_emb, params["w_attn_k"],
                             preferred_element_type=f32)
                  + params["b_attn"].reshape(1, 1, S)).astype(f32)            # [N, L, S]

    # Validity mask precomputed outside the kernel (1.0 = valid position).
    lens = attn_emb_len.astype(jnp.int32).reshape(N, 1)
    pos = jax.lax.broadcasted_iota(jnp.int32, (N, L), 1)
    valid = (pos < lens).astype(f32)                                          # [N, L]

    TV, V_pad = _vocab_tiling(V, vocab_tile)
    n_vtiles = V_pad // TV
    assert params["w_cls_pad"].shape[1] == V_pad, "vocab_tile mismatch with prepare_params"

    P1 = _round_up(H + L, 128)   # packed [h1 | attn_w | pad] slab width

    def const2(shape):
        return pl.BlockSpec(shape, lambda j: (0, 0))

    def const3(shape):
        return pl.BlockSpec(shape, lambda j: (0, 0, 0))

    in_specs = [
        const2((N, 2 * E)),          # es = [word_emb | struct_emb]
        const2((N, H)),              # h0
        const3((N, L, A)),           # attn_emb (native dtype)
        const3((N, L, S)),           # k_proj (bias folded)
        const2((N, L)),              # valid mask
        const2((H, S + 3 * H)),      # fused [w_attn_q | w_hh]
        const2((1, S)),              # v_attn
        const2((2 * E, 3 * H)),      # fused embed/struct input weights
        const2((A, 3 * H)),          # ctx_proj folded into GRU input weights
        const2((1, 2 * H)),          # b_rz (pre-summed)
        const2((1, H)),              # b_in
        const2((1, H)),              # b_hn
        pl.BlockSpec((H, TV), lambda j: (0, j)),   # w_cls vocab tile
        pl.BlockSpec((1, TV), lambda j: (0, j)),   # b_cls vocab tile
    ]
    out_specs = (
        pl.BlockSpec((N, P1), lambda j: (0, 0)),   # packed [h1 | attn_w | pad]
        pl.BlockSpec((N, TV), lambda j: (0, j)),   # padded logits
    )
    out_shapes = (
        jax.ShapeDtypeStruct((N, P1), f32),
        jax.ShapeDtypeStruct((N, V_pad), f32),
    )

    packed, logit_pad = pl.pallas_call(
        decoder_step_kernel,
        out_shape=out_shapes,
        grid_spec=pltpu.PrefetchScalarGridSpec(
            num_scalar_prefetch=0,
            grid=(n_vtiles,),
            in_specs=in_specs,
            out_specs=out_specs,
            scratch_shapes=[pltpu.VMEM((N, H), f32)],
        ),
        compiler_params=pltpu.CompilerParams(
            # The vocab-tile axis carries h1 through VMEM scratch -> "arbitrary".
            dimension_semantics=("arbitrary",),
        ),
    )(es, h0, attn_emb, k_proj, valid,
      params["w_h0"], params["v_attn"],
      params["w_es"], params["w_ctx_ih"],
      params["b_rz"], params["b_in"], params["b_hn"],
      params["w_cls_pad"], params["b_cls_pad"])

    h1 = packed[:, :H]
    attn_w = packed[:, H:H + L]
    logit = logit_pad[:, :V]

    return {
        "state": h1[None, :, :],       # [1, N, H]  (num_dire * num_layers, N, H)
        "embed": h1[:, None, :],       # [N, 1, H]  (GRU output == new hidden)
        "logit": logit[:, None, :],    # [N, 1, V]
        "attn_weight": attn_w,         # [N, L]
    }


# ----------------------------------------------------------------------------
# Deterministic synthetic parameter init (shapes from the module __init__)
# ----------------------------------------------------------------------------
def init_params(key, *, emb_dim, vocab_size, struct_vocab_size,
                attn_emb_dim, d_model, attn_size):
    ks = jax.random.split(key, 16)
    s = 0.1
    f32 = jnp.float32
    E, A, H, S, V = emb_dim, attn_emb_dim, d_model, attn_size, vocab_size
    return {
        # embeddings
        "word_emb":   s * jax.random.normal(ks[0], (V, E), f32),
        "struct_emb": s * jax.random.normal(ks[1], (struct_vocab_size, E), f32),
        # Seq2SeqAttention: h2attn Linear(H + A -> S), split into dec/enc parts
        "w_attn_q":   s * jax.random.normal(ks[2], (H, S), f32),
        "w_attn_k":   s * jax.random.normal(ks[3], (A, S), f32),
        "b_attn":     s * jax.random.normal(ks[4], (1, S), f32),
        "v_attn":     jax.random.normal(ks[5], (1, S), f32),
        # ctx_proj: Linear(A -> E)
        "w_ctx":      s * jax.random.normal(ks[6], (A, E), f32),
        "b_ctx":      s * jax.random.normal(ks[7], (1, E), f32),
        # GRU(input_size=3E, hidden=H), gate order [r, z, n] as in PyTorch
        "w_ih":       s * jax.random.normal(ks[8], (3 * E, 3 * H), f32),
        "w_hh":       s * jax.random.normal(ks[9], (H, 3 * H), f32),
        "b_ih":       s * jax.random.normal(ks[10], (1, 3 * H), f32),
        "b_hh":       s * jax.random.normal(ks[11], (1, 3 * H), f32),
        # classifier: Linear(H -> V)
        "w_cls":      s * jax.random.normal(ks[12], (H, V), f32),
        "b_cls":      s * jax.random.normal(ks[13], (1, V), f32),
    }


if __name__ == "__main__":
    # small shapes consistent with the module
    N = 2            # batch
    L = 8            # src_max_len
    E = 32           # emb_dim
    A = 32           # attn_emb_dim
    H = 32           # d_model
    S = H            # attn_size (default = d_model)
    V = 50           # vocab_size
    SV = 10          # struct_vocab_size
    FC = 32          # fc_emb_dim (unused in the forward compute)

    key = jax.random.PRNGKey(0)
    kp, kw, ks, ka, kf = jax.random.split(key, 5)

    params = init_params(kp, emb_dim=E, vocab_size=V, struct_vocab_size=SV,
                         attn_emb_dim=A, d_model=H, attn_size=S)
    params = prepare_params(params)   # one-time weight fusion / padding

    input_dict = {
        "word": jax.random.randint(kw, (N, 1), 0, V, dtype=jnp.int32),
        "structure": jax.random.randint(ks, (N,), 0, SV, dtype=jnp.int32),
        "fc_emb": jax.random.normal(kf, (N, FC), jnp.float32),
        "attn_emb": jax.random.normal(ka, (N, L, A), jnp.float32),
        "attn_emb_len": jnp.array([L, 5], dtype=jnp.int32),
        "state": None,
    }

    out = struct_bah_attn_decoder_forward(params, input_dict)
    jax.block_until_ready(out["logit"])
    jax.block_until_ready(out["state"])
    jax.block_until_ready(out["attn_weight"])

    assert out["state"].shape == (1, N, H)
    assert out["embed"].shape == (N, 1, H)
    assert out["logit"].shape == (N, 1, V)
    assert out["attn_weight"].shape == (N, L)
    print("KERNEL_OK")
</pallas_src>

<mosaic_0001>
module attributes {stable_mosaic.version = 11 : i64} {
  func.func @decoder_step_kernel(%arg0: i32, %arg1: memref<2x64xf32, #tpu.memory_space<vmem>>, %arg2: memref<2x32xf32, #tpu.memory_space<vmem>>, %arg3: memref<2x8x32xf32, #tpu.memory_space<vmem>>, %arg4: memref<2x8x32xf32, #tpu.memory_space<vmem>>, %arg5: memref<2x8xf32, #tpu.memory_space<vmem>>, %arg6: memref<32x128xf32, #tpu.memory_space<vmem>>, %arg7: memref<1x32xf32, #tpu.memory_space<vmem>>, %arg8: memref<64x96xf32, #tpu.memory_space<vmem>>, %arg9: memref<32x96xf32, #tpu.memory_space<vmem>>, %arg10: memref<1x64xf32, #tpu.memory_space<vmem>>, %arg11: memref<1x32xf32, #tpu.memory_space<vmem>>, %arg12: memref<1x32xf32, #tpu.memory_space<vmem>>, %arg13: memref<32x128xf32, #tpu.memory_space<vmem>>, %arg14: memref<1x128xf32, #tpu.memory_space<vmem>>, %arg15: memref<2x128xf32, #tpu.memory_space<vmem>>, %arg16: memref<2x128xf32, #tpu.memory_space<vmem>>, %arg17: memref<2x32xf32, #tpu.memory_space<vmem>>) attributes {dimension_semantics = [#tpu.dimension_semantics<arbitrary>], iteration_bounds = array<i64: 1>, scalar_prefetch = 0 : i64, scratch_operands = 1 : i64, tpu.core_type = #tpu.core_type<tc>, window_params = [{pipeline_mode = #tpu.pipeline_mode<synchronous>, transform_indices = @transform_0, window_bounds = array<i64: 2, 64>}, {pipeline_mode = #tpu.pipeline_mode<synchronous>, transform_indices = @transform_1, window_bounds = array<i64: 2, 32>}, {pipeline_mode = #tpu.pipeline_mode<synchronous>, transform_indices = @transform_2, window_bounds = array<i64: 2, 8, 32>}, {pipeline_mode = #tpu.pipeline_mode<synchronous>, transform_indices = @transform_3, window_bounds = array<i64: 2, 8, 32>}, {pipeline_mode = #tpu.pipeline_mode<synchronous>, transform_indices = @transform_4, window_bounds = array<i64: 2, 8>}, {pipeline_mode = #tpu.pipeline_mode<synchronous>, transform_indices = @transform_5, window_bounds = array<i64: 32, 128>}, {pipeline_mode = #tpu.pipeline_mode<synchronous>, transform_indices = @transform_6, window_bounds = array<i64: 1, 32>}, {pipeline_mode = #tpu.pipeline_mode<synchronous>, transform_indices = @transform_7, window_bounds = array<i64: 64, 96>}, {pipeline_mode = #tpu.pipeline_mode<synchronous>, transform_indices = @transform_8, window_bounds = array<i64: 32, 96>}, {pipeline_mode = #tpu.pipeline_mode<synchronous>, transform_indices = @transform_9, window_bounds = array<i64: 1, 64>}, {pipeline_mode = #tpu.pipeline_mode<synchronous>, transform_indices = @transform_10, window_bounds = array<i64: 1, 32>}, {pipeline_mode = #tpu.pipeline_mode<synchronous>, transform_indices = @transform_11, window_bounds = array<i64: 1, 32>}, {transform_indices = @transform_12, window_bounds = array<i64: 32, 128>}, {transform_indices = @transform_13, window_bounds = array<i64: 1, 128>}, {pipeline_mode = #tpu.pipeline_mode<synchronous>, transform_indices = @transform_14, window_bounds = array<i64: 2, 128>}, {transform_indices = @transform_15, window_bounds = array<i64: 2, 128>}]} {
    %c0_i32 = arith.constant 0 : i32
    %0 = arith.cmpi eq, %arg0, %c0_i32 : i32
    %1 = arith.extui %0 : i1 to i32
    %c0_i32_0 = arith.constant 0 : i32
    %2 = arith.cmpi ne, %1, %c0_i32_0 : i32
    scf.if %2 {
      %c0_8 = arith.constant 0 : index
      %c0_9 = arith.constant 0 : index
      %10 = vector.load %arg2[%c0_8, %c0_9] : memref<2x32xf32, #tpu.memory_space<vmem>>, vector<2x32xf32>
      %c0_10 = arith.constant 0 : index
      %c0_11 = arith.constant 0 : index
      %11 = vector.load %arg6[%c0_10, %c0_11] : memref<32x128xf32, #tpu.memory_space<vmem>>, vector<32x128xf32>
      %cst_12 = arith.constant dense<0.000000e+00> : vector<2x128xf32>
      %12 = tpu.matmul %10, %11, %cst_12 {dimension_numbers = #tpu.dot_dimension_numbers<[1], [0], [0], [1], [0, 0, 1, 1], [], []>} : vector<2x32xf32>, vector<32x128xf32>, vector<2x128xf32> -> vector<2x128xf32>
      %13 = vector.extract_strided_slice %12 {offsets = [0, 0], sizes = [2, 32], strides = [1, 1]} : vector<2x128xf32> to vector<2x32xf32>
      %14 = vector.extract_strided_slice %12 {offsets = [0, 32], sizes = [2, 96], strides = [1, 1]} : vector<2x128xf32> to vector<2x96xf32>
      %15 = vector.shape_cast %13 : vector<2x32xf32> to vector<2x1x32xf32>
      %c0_13 = arith.constant 0 : index
      %c0_14 = arith.constant 0 : index
      %c0_15 = arith.constant 0 : index
      %16 = vector.load %arg4[%c0_13, %c0_14, %c0_15] : memref<2x8x32xf32, #tpu.memory_space<vmem>>, vector<2x8x32xf32>
      %17 = vector.broadcast %15 : vector<2x1x32xf32> to vector<2x8x32xf32>
      %18 = arith.addf %17, %16 : vector<2x8x32xf32>
      %19 = math.tanh %18 : vector<2x8x32xf32>
      %c0_16 = arith.constant 0 : index
      %c0_17 = arith.constant 0 : index
      %20 = vector.load %arg7[%c0_16, %c0_17] : memref<1x32xf32, #tpu.memory_space<vmem>>, vector<1x32xf32>
      %21 = vector.shape_cast %20 : vector<1x32xf32> to vector<1x1x32xf32>
      %22 = vector.broadcast %21 : vector<1x1x32xf32> to vector<2x8x32xf32>
      %23 = arith.mulf %19, %22 : vector<2x8x32xf32>
      %cst_18 = arith.constant dense<0.000000e+00> : vector<2x8xf32>
      %24 = vector.multi_reduction <add>, %23, %cst_18 [2] : vector<2x8x32xf32> to vector<2x8xf32>
      %c0_19 = arith.constant 0 : index
      %c0_20 = arith.constant 0 : index
      %25 = vector.load %arg5[%c0_19, %c0_20] : memref<2x8xf32, #tpu.memory_space<vmem>>, vector<2x8xf32>
      %cst_21 = arith.constant 0.000000e+00 : f32
      %26 = vector.broadcast %cst_21 : f32 to vector<2x8xf32>
      %27 = arith.cmpf ogt, %25, %26 : vector<2x8xf32>
      %cst_22 = arith.constant -1.000000e+10 : f32
      %28 = vector.broadcast %cst_22 : f32 to vector<2x8xf32>
      %29 = arith.select %27, %24, %28 : vector<2x8xi1>, vector<2x8xf32>
      %cst_23 = arith.constant dense<0xFF800000> : vector<2xf32>
      %30 = vector.multi_reduction <maximumf>, %29, %cst_23 [1] : vector<2x8xf32> to vector<2xf32>
      %31 = vector.shape_cast %30 : vector<2xf32> to vector<2x1xf32>
      %32 = vector.broadcast %31 : vector<2x1xf32> to vector<2x8xf32>
      %33 = arith.subf %29, %32 : vector<2x8xf32>
      %34 = math.exp %33 : vector<2x8xf32>
      %cst_24 = arith.constant dense<0.000000e+00> : vector<2xf32>
      %35 = vector.multi_reduction <add>, %34, %cst_24 [1] : vector<2x8xf32> to vector<2xf32>
      %36 = vector.shape_cast %35 : vector<2xf32> to vector<2x1xf32>
      %37 = vector.broadcast %36 : vector<2x1xf32> to vector<2x8xf32>
      %38 = arith.divf %34, %37 : vector<2x8xf32>
      %c0_25 = arith.constant 0 : index
      %c0_26 = arith.constant 0 : index
      %c0_27 = arith.constant 0 : index
      %39 = vector.load %arg3[%c0_25, %c0_26, %c0_27] : memref<2x8x32xf32, #tpu.memory_space<vmem>>, vector<2x8x32xf32>
      %40 = vector.shape_cast %38 : vector<2x8xf32> to vector<2x8x1xf32>
      %41 = vector.broadcast %40 : vector<2x8x1xf32> to vector<2x8x32xf32>
      %42 = arith.mulf %41, %39 : vector<2x8x32xf32>
      %cst_28 = arith.constant dense<0.000000e+00> : vector<2x32xf32>
      %43 = vector.multi_reduction <add>, %42, %cst_28 [1] : vector<2x8x32xf32> to vector<2x32xf32>
      %c0_29 = arith.constant 0 : index
      %c0_30 = arith.constant 0 : index
      %44 = vector.load %arg1[%c0_29, %c0_30] : memref<2x64xf32, #tpu.memory_space<vmem>>, vector<2x64xf32>
      %c0_31 = arith.constant 0 : index
      %c0_32 = arith.constant 0 : index
      %45 = vector.load %arg8[%c0_31, %c0_32] : memref<64x96xf32, #tpu.memory_space<vmem>>, vector<64x96xf32>
      %cst_33 = arith.constant dense<0.000000e+00> : vector<2x96xf32>
      %46 = tpu.matmul %44, %45, %cst_33 {dimension_numbers = #tpu.dot_dimension_numbers<[1], [0], [0], [1], [0, 0, 1, 1], [], []>} : vector<2x64xf32>, vector<64x96xf32>, vector<2x96xf32> -> vector<2x96xf32>
      %c0_34 = arith.constant 0 : index
      %c0_35 = arith.constant 0 : index
      %47 = vector.load %arg9[%c0_34, %c0_35] : memref<32x96xf32, #tpu.memory_space<vmem>>, vector<32x96xf32>
      %cst_36 = arith.constant dense<0.000000e+00> : vector<2x96xf32>
      %48 = tpu.matmul %43, %47, %cst_36 {dimension_numbers = #tpu.dot_dimension_numbers<[1], [0], [0], [1], [0, 0, 1, 1], [], []>} : vector<2x32xf32>, vector<32x96xf32>, vector<2x96xf32> -> vector<2x96xf32>
      %49 = arith.addf %46, %48 : vector<2x96xf32>
      %50 = vector.extract_strided_slice %49 {offsets = [0, 0], sizes = [2, 64], strides = [1, 1]} : vector<2x96xf32> to vector<2x64xf32>
      %51 = vector.extract_strided_slice %14 {offsets = [0, 0], sizes = [2, 64], strides = [1, 1]} : vector<2x96xf32> to vector<2x64xf32>
      %52 = arith.addf %50, %51 : vector<2x64xf32>
      %c0_37 = arith.constant 0 : index
      %c0_38 = arith.constant 0 : index
      %53 = vector.load %arg10[%c0_37, %c0_38] : memref<1x64xf32, #tpu.memory_space<vmem>>, vector<1x64xf32>
      %54 = vector.broadcast %53 : vector<1x64xf32> to vector<2x64xf32>
      %55 = arith.addf %52, %54 : vector<2x64xf32>
      %56 = arith.negf %55 : vector<2x64xf32>
      %57 = math.exp %56 : vector<2x64xf32>
      %cst_39 = arith.constant 1.000000e+00 : f32
      %58 = vector.broadcast %cst_39 : f32 to vector<2x64xf32>
      %59 = arith.addf %58, %57 : vector<2x64xf32>
      %60 = arith.divf %58, %59 : vector<2x64xf32>
      %61 = vector.extract_strided_slice %60 {offsets = [0, 0], sizes = [2, 32], strides = [1, 1]} : vector<2x64xf32> to vector<2x32xf32>
      %62 = vector.extract_strided_slice %60 {offsets = [0, 32], sizes = [2, 32], strides = [1, 1]} : vector<2x64xf32> to vector<2x32xf32>
      %63 = vector.extract_strided_slice %49 {offsets = [0, 64], sizes = [2, 32], strides = [1, 1]} : vector<2x96xf32> to vector<2x32xf32>
      %c0_40 = arith.constant 0 : index
      %c0_41 = arith.constant 0 : index
      %64 = vector.load %arg11[%c0_40, %c0_41] : memref<1x32xf32, #tpu.memory_space<vmem>>, vector<1x32xf32>
      %65 = vector.broadcast %64 : vector<1x32xf32> to vector<2x32xf32>
      %66 = arith.addf %63, %65 : vector<2x32xf32>
      %67 = vector.extract_strided_slice %14 {offsets = [0, 64], sizes = [2, 32], strides = [1, 1]} : vector<2x96xf32> to vector<2x32xf32>
      %c0_42 = arith.constant 0 : index
      %c0_43 = arith.constant 0 : index
      %68 = vector.load %arg12[%c0_42, %c0_43] : memref<1x32xf32, #tpu.memory_space<vmem>>, vector<1x32xf32>
      %69 = vector.broadcast %68 : vector<1x32xf32> to vector<2x32xf32>
      %70 = arith.addf %67, %69 : vector<2x32xf32>
      %71 = arith.mulf %61, %70 : vector<2x32xf32>
      %72 = arith.addf %66, %71 : vector<2x32xf32>
      %73 = math.tanh %72 : vector<2x32xf32>
      %cst_44 = arith.constant 1.000000e+00 : f32
      %74 = vector.broadcast %cst_44 : f32 to vector<2x32xf32>
      %75 = arith.subf %74, %62 : vector<2x32xf32>
      %76 = arith.mulf %75, %73 : vector<2x32xf32>
      %77 = arith.mulf %62, %10 : vector<2x32xf32>
      %78 = arith.addf %76, %77 : vector<2x32xf32>
      %c0_45 = arith.constant 0 : index
      %c0_46 = arith.constant 0 : index
      %79 = vector.load %arg17[%c0_45, %c0_46] : memref<2x32xf32, #tpu.memory_space<vmem>>, vector<2x32xf32>
      tpu.vector_store %arg17[%c0_45, %c0_46], %78 {strides = array<i32>} : memref<2x32xf32, #tpu.memory_space<vmem>>, vector<2x32xf32>,
      %cst_47 = arith.constant 0.000000e+00 : f32
      %80 = vector.broadcast %cst_47 : f32 to vector<2x88xf32>
      %81 = tpu.concatenate %78, %38, %80 in 1 : vector<2x32xf32>, vector<2x8xf32>, vector<2x88xf32> -> vector<2x128xf32>
      %c0_48 = arith.constant 0 : index
      %c0_49 = arith.constant 0 : index
      %82 = vector.load %arg15[%c0_48, %c0_49] : memref<2x128xf32, #tpu.memory_space<vmem>>, vector<2x128xf32>
      tpu.vector_store %arg15[%c0_48, %c0_49], %81 {strides = array<i32>} : memref<2x128xf32, #tpu.memory_space<vmem>>, vector<2x128xf32>,
    } else {
    }
    %c0 = arith.constant 0 : index
    %c0_1 = arith.constant 0 : index
    %3 = vector.load %arg17[%c0, %c0_1] : memref<2x32xf32, #tpu.memory_space<vmem>>, vector<2x32xf32>
    %c0_2 = arith.constant 0 : index
    %c0_3 = arith.constant 0 : index
    %4 = vector.load %arg13[%c0_2, %c0_3] : memref<32x128xf32, #tpu.memory_space<vmem>>, vector<32x128xf32>
    %cst = arith.constant dense<0.000000e+00> : vector<2x128xf32>
    %5 = tpu.matmul %3, %4, %cst {dimension_numbers = #tpu.dot_dimension_numbers<[1], [0], [0], [1], [0, 0, 1, 1], [], []>} : vector<2x32xf32>, vector<32x128xf32>, vector<2x128xf32> -> vector<2x128xf32>
    %c0_4 = arith.constant 0 : index
    %c0_5 = arith.constant 0 : index
    %6 = vector.load %arg14[%c0_4, %c0_5] : memref<1x128xf32, #tpu.memory_space<vmem>>, vector<1x128xf32>
    %7 = vector.broadcast %6 : vector<1x128xf32> to vector<2x128xf32>
    %8 = arith.addf %5, %7 : vector<2x128xf32>
    %c0_6 = arith.constant 0 : index
    %c0_7 = arith.constant 0 : index
    %9 = vector.load %arg16[%c0_6, %c0_7] : memref<2x128xf32, #tpu.memory_space<vmem>>, vector<2x128xf32>
    tpu.vector_store %arg16[%c0_6, %c0_7], %8 {strides = array<i32>} : memref<2x128xf32, #tpu.memory_space<vmem>>, vector<2x128xf32>,
    return
  }
  func.func @transform_0(%arg0: i32) -> (i32, i32) {
    %c0_i32 = arith.constant 0 : i32
    %c0_i32_0 = arith.constant 0 : i32
    %c0_i32_1 = arith.constant 0 : i32
    return %c0_i32, %c0_i32_0 : i32, i32
  }
  func.func @transform_1(%arg0: i32) -> (i32, i32) {
    %c0_i32 = arith.constant 0 : i32
    %c0_i32_0 = arith.constant 0 : i32
    %c0_i32_1 = arith.constant 0 : i32
    return %c0_i32, %c0_i32_0 : i32, i32
  }
  func.func @transform_2(%arg0: i32) -> (i32, i32, i32) {
    %c0_i32 = arith.constant 0 : i32
    %c0_i32_0 = arith.constant 0 : i32
    %c0_i32_1 = arith.constant 0 : i32
    %c0_i32_2 = arith.constant 0 : i32
    return %c0_i32, %c0_i32_0, %c0_i32_1 : i32, i32, i32
  }
  func.func @transform_3(%arg0: i32) -> (i32, i32, i32) {
    %c0_i32 = arith.constant 0 : i32
    %c0_i32_0 = arith.constant 0 : i32
    %c0_i32_1 = arith.constant 0 : i32
    %c0_i32_2 = arith.constant 0 : i32
    return %c0_i32, %c0_i32_0, %c0_i32_1 : i32, i32, i32
  }
  func.func @transform_4(%arg0: i32) -> (i32, i32) {
    %c0_i32 = arith.constant 0 : i32
    %c0_i32_0 = arith.constant 0 : i32
    %c0_i32_1 = arith.constant 0 : i32
    return %c0_i32, %c0_i32_0 : i32, i32
  }
  func.func @transform_5(%arg0: i32) -> (i32, i32) {
    %c0_i32 = arith.constant 0 : i32
    %c0_i32_0 = arith.constant 0 : i32
    %c0_i32_1 = arith.constant 0 : i32
    return %c0_i32, %c0_i32_0 : i32, i32
  }
  func.func @transform_6(%arg0: i32) -> (i32, i32) {
    %c0_i32 = arith.constant 0 : i32
    %c0_i32_0 = arith.constant 0 : i32
    %c0_i32_1 = arith.constant 0 : i32
    return %c0_i32, %c0_i32_0 : i32, i32
  }
  func.func @transform_7(%arg0: i32) -> (i32, i32) {
    %c0_i32 = arith.constant 0 : i32
    %c0_i32_0 = arith.constant 0 : i32
    %c0_i32_1 = arith.constant 0 : i32
    return %c0_i32, %c0_i32_0 : i32, i32
  }
  func.func @transform_8(%arg0: i32) -> (i32, i32) {
    %c0_i32 = arith.constant 0 : i32
    %c0_i32_0 = arith.constant 0 : i32
    %c0_i32_1 = arith.constant 0 : i32
    return %c0_i32, %c0_i32_0 : i32, i32
  }
  func.func @transform_9(%arg0: i32) -> (i32, i32) {
    %c0_i32 = arith.constant 0 : i32
    %c0_i32_0 = arith.constant 0 : i32
    %c0_i32_1 = arith.constant 0 : i32
    return %c0_i32, %c0_i32_0 : i32, i32
  }
  func.func @transform_10(%arg0: i32) -> (i32, i32) {
    %c0_i32 = arith.constant 0 : i32
    %c0_i32_0 = arith.constant 0 : i32
    %c0_i32_1 = arith.constant 0 : i32
    return %c0_i32, %c0_i32_0 : i32, i32
  }
  func.func @transform_11(%arg0: i32) -> (i32, i32) {
    %c0_i32 = arith.constant 0 : i32
    %c0_i32_0 = arith.constant 0 : i32
    %c0_i32_1 = arith.constant 0 : i32
    return %c0_i32, %c0_i32_0 : i32, i32
  }
  func.func @transform_12(%arg0: i32) -> (i32, i32) {
    %c0_i32 = arith.constant 0 : i32
    %c0_i32_0 = arith.constant 0 : i32
    return %c0_i32, %arg0 : i32, i32
  }
  func.func @transform_13(%arg0: i32) -> (i32, i32) {
    %c0_i32 = arith.constant 0 : i32
    %c0_i32_0 = arith.constant 0 : i32
    return %c0_i32, %arg0 : i32, i32
  }
  func.func @transform_14(%arg0: i32) -> (i32, i32) {
    %c0_i32 = arith.constant 0 : i32
    %c0_i32_0 = arith.constant 0 : i32
    %c0_i32_1 = arith.constant 0 : i32
    return %c0_i32, %c0_i32_0 : i32, i32
  }
  func.func @transform_15(%arg0: i32) -> (i32, i32) {
    %c0_i32 = arith.constant 0 : i32
    %c0_i32_0 = arith.constant 0 : i32
    return %c0_i32, %arg0 : i32, i32
  }
}

</mosaic_0001>

<llo_original>
// kernel: tpu_custom_call.1
$region0: #{tpu_custom_call.1}
  #allocation0 [shape = 'u32[]', space=smem, size = 0x4, offset = 0x4, fixed_abs, tag = 'smem constant byte address 0x4 - core index']
  #allocation1 [shape = 'u32[72,128]{1,0:T(1,128)}', space=vmem, size = 0x9000, scoped, tag = 'internal scratch']
  #allocation2 [shape = 'f32[2,32]{1,0:T(2,128)}', space=vmem, size = 0x400, scoped, tag = 'scratch operand']
  %s0 = inlined_call_operand.hbm [shape: f32[2,64], index: 0, kind: input, shape index: {}]
  %s1 = inlined_call_operand.hbm [shape: f32[2,32], index: 1, kind: input, shape index: {}]
  %s2 = inlined_call_operand.hbm [shape: f32[2,8,32], index: 2, kind: input, shape index: {}]
  %s3 = inlined_call_operand.hbm [shape: f32[2,8,32], index: 3, kind: input, shape index: {}]
  %s4 = inlined_call_operand.vmem [shape: f32[2,8], index: 4, kind: input, shape index: {}]
  %s5 = inlined_call_operand.hbm [shape: f32[32,128], index: 5, kind: input, shape index: {}]
  %s6 = inlined_call_operand.vmem [shape: f32[1,32], index: 6, kind: input, shape index: {}]
  %s7 = inlined_call_operand.hbm [shape: f32[64,96], index: 7, kind: input, shape index: {}]
  %s8 = inlined_call_operand.hbm [shape: f32[32,96], index: 8, kind: input, shape index: {}]
  %s9 = inlined_call_operand.vmem [shape: f32[1,64], index: 9, kind: input, shape index: {}]
  %s10 = inlined_call_operand.vmem [shape: f32[1,32], index: 10, kind: input, shape index: {}]
  %s11 = inlined_call_operand.vmem [shape: f32[1,32], index: 11, kind: input, shape index: {}]
  %s12 = inlined_call_operand.hbm [shape: f32[32,128], index: 12, kind: input, shape index: {}]
  %s13 = inlined_call_operand.vmem [shape: f32[1,128], index: 13, kind: input, shape index: {}]
  %s14 = inlined_call_operand.hbm [shape: f32[2,128], index: 14, kind: output, shape index: {0}]
  %s15 = inlined_call_operand.hbm [shape: f32[2,128], index: 15, kind: output, shape index: {1}]
  %16 = xla_tuple %s14, %s15
  %s17 = sld [smem:[#allocation0]]
  $region110: #{tpu_custom_call.1} parent=0
    _
  %s19 = ssub.s32 1, %s17
  %s20 = scalar_select 0, %s19, %s17
  $region1: #{tpu_custom_call.1} parent=0
    #allocation3 [shape = 'u8[1024]{0}', space=vmem, size = 0x400, scoped, tag = 'input window, operand 0, single buffered']
    #allocation4 [shape = 's32[1]{0}', space=sflag, size = 0x4, scoped, tag = 'scoped memory for tpu_custom_call.1']
    #allocation5 [shape = 's32[1]{0}', space=sflag, size = 0x4, scoped, tag = 'scoped memory for tpu_custom_call.1']
    #allocation6 [shape = 'u8[1024]{0}', space=vmem, size = 0x400, scoped, tag = 'input window, operand 1, single buffered']
    #allocation7 [shape = 's32[1]{0}', space=sflag, size = 0x4, scoped, tag = 'scoped memory for tpu_custom_call.1']
    #allocation8 [shape = 'u8[8192]{0}', space=vmem, size = 0x2000, scoped, tag = 'input window, operand 2, single buffered']
    #allocation9 [shape = 'u8[8192]{0}', space=vmem, size = 0x2000, scoped, tag = 'input window, operand 3, single buffered']
    #allocation10 [shape = 's32[1]{0}', space=sflag, size = 0x4, scoped, tag = 'scoped memory for tpu_custom_call.1']
    #allocation11 [shape = 'u8[16384]{0}', space=vmem, size = 0x4000, scoped, tag = 'input window, operand 5, single buffered']
    #allocation12 [shape = 'u8[32768]{0}', space=vmem, size = 0x8000, scoped, tag = 'input window, operand 7, single buffered']
    #allocation13 [shape = 's32[1]{0}', space=sflag, size = 0x4, scoped, tag = 'scoped memory for tpu_custom_call.1']
    #allocation14 [shape = 'u8[16384]{0}', space=vmem, size = 0x4000, scoped, tag = 'input window, operand 8, single buffered']
    #allocation15 [shape = 'u8[16384]{0}', space=vmem, size = 0x4000, scoped, tag = 'input window, operand 12, single buffered']
    #allocation16 [shape = 's32[1]{0}', space=sflag, size = 0x4, scoped, tag = 'scoped memory for tpu_custom_call.1']
    #allocation17 [shape = 'u8[1024]{0}', space=vmem, size = 0x400, scoped, tag = 'output window, operand 0, single buffered']
    #allocation18 [shape = 'u8[1024]{0}', space=vmem, size = 0x400, scoped, tag = 'output window, operand 1, single buffered']
    #allocation19 [shape = 's32[1]{0}', space=sflag, size = 0x4, scoped, tag = 'scoped memory for tpu_custom_call.1']
    %21 = vsyncpa [#allocation4], 0
    %22 = vsyncpa [#allocation7], 0
    %23 = vsyncpa [#allocation10], 0
    %24 = vsyncpa [#allocation13], 0
    %25 = vsyncpa [#allocation16], 0
    %26 = vsyncpa [#allocation5], 0
    %27 = vsyncpa [#allocation19], 0
    // Predicated region
    $region2: #{tpu_custom_call.1} parent=1 // pred_check
      _
    $region3: #{tpu_custom_call.1} parent=1 // pred_check_branch
      %29 = sbr.rel (0) target = $region5
    $region4: #{tpu_custom_call.1} parent=1 // pred_region
      %31 = vsyncadd [#allocation4], 0
      %s33 = sshll.u32 %s0, 4
      %s34 = int_to_ptr.hbm [resolvable:$true] %s33
      %s35 = sshll.u32 [#allocation3], 4
      %s36 = int_to_ptr.vmem [resolvable:$true] %s35
      %38 = dma.hbm_to_vmem [thread:$0]  %s34, 32, %s36, [#allocation4]
    $region5: #{tpu_custom_call.1} parent=1 // pred_fallthru
      _
    // Predicated region
    $region6: #{tpu_custom_call.1} parent=1 // pred_check
      _
    $region7: #{tpu_custom_call.1} parent=1 // pred_check_branch
      %40 = sbr.rel (0) target = $region9
    $region8: #{tpu_custom_call.1} parent=1 // pred_region
      %42 = vsyncadd [#allocation7], 0
      %s44 = sshll.u32 %s1, 4
      %s45 = int_to_ptr.hbm [resolvable:$true] %s44
      %s46 = sshll.u32 [#allocation6], 4
      %s47 = int_to_ptr.vmem [resolvable:$true] %s46
      %49 = dma.hbm_to_vmem [thread:$0]  %s45, 32, %s47, [#allocation7]
    $region9: #{tpu_custom_call.1} parent=1 // pred_fallthru
      _
    // Predicated region
    $region10: #{tpu_custom_call.1} parent=1 // pred_check
      _
    $region11: #{tpu_custom_call.1} parent=1 // pred_check_branch
      %51 = sbr.rel (0) target = $region13
    $region12: #{tpu_custom_call.1} parent=1 // pred_region
      %53 = vsyncadd [#allocation7], 0
      %s54 = sshll.u32 %s2, 4
      %s55 = int_to_ptr.hbm [resolvable:$true] %s54
      %s56 = sshll.u32 [#allocation8], 4
      %s57 = int_to_ptr.vmem [resolvable:$true] %s56
      %62 = dma.hbm_to_vmem [thread:$0]  %s55, 256, %s57, [#allocation7], 128, 128, 8
    $region13: #{tpu_custom_call.1} parent=1 // pred_fallthru
      _
    // Predicated region
    $region14: #{tpu_custom_call.1} parent=1 // pred_check
      _
    $region15: #{tpu_custom_call.1} parent=1 // pred_check_branch
      %64 = sbr.rel (0) target = $region17
    $region16: #{tpu_custom_call.1} parent=1 // pred_region
      %66 = vsyncadd [#allocation10], 0
      %s67 = sshll.u32 %s3, 4
      %s68 = int_to_ptr.hbm [resolvable:$true] %s67
      %s69 = sshll.u32 [#allocation9], 4
      %s70 = int_to_ptr.vmem [resolvable:$true] %s69
      %75 = dma.hbm_to_vmem [thread:$0]  %s68, 256, %s70, [#allocation10], 128, 128, 8
    $region17: #{tpu_custom_call.1} parent=1 // pred_fallthru
      _
    // Predicated region
    $region18: #{tpu_custom_call.1} parent=1 // pred_check
      _
    $region19: #{tpu_custom_call.1} parent=1 // pred_check_branch
      %77 = sbr.rel (0) target = $region21
    $region20: #{tpu_custom_call.1} parent=1 // pred_region
      _
    $region21: #{tpu_custom_call.1} parent=1 // pred_fallthru
      _
    // Predicated region
    $region22: #{tpu_custom_call.1} parent=1 // pred_check
      _
    $region23: #{tpu_custom_call.1} parent=1 // pred_check_branch
      %79 = sbr.rel (0) target = $region25
    $region24: #{tpu_custom_call.1} parent=1 // pred_region
      %81 = vsyncadd [#allocation10], 0
      %s82 = sshll.u32 %s5, 4
      %s83 = int_to_ptr.hbm [resolvable:$true] %s82
      %s84 = sshll.u32 [#allocation11], 4
      %s85 = int_to_ptr.vmem [resolvable:$true] %s84
      %90 = dma.hbm_to_vmem [thread:$0]  %s83, 512, %s85, [#allocation10], 128, 128, 8
    $region25: #{tpu_custom_call.1} parent=1 // pred_fallthru
      _
    // Predicated region
    $region26: #{tpu_custom_call.1} parent=1 // pred_check
      _
    $region27: #{tpu_custom_call.1} parent=1 // pred_check_branch
      %92 = sbr.rel (0) target = $region29
    $region28: #{tpu_custom_call.1} parent=1 // pred_region
      _
    $region29: #{tpu_custom_call.1} parent=1 // pred_fallthru
      _
    // Predicated region
    $region30: #{tpu_custom_call.1} parent=1 // pred_check
      _
    $region31: #{tpu_custom_call.1} parent=1 // pred_check_branch
      %94 = sbr.rel (0) target = $region33
    $region32: #{tpu_custom_call.1} parent=1 // pred_region
      %96 = vsyncadd [#allocation13], 0
      %s97 = sshll.u32 %s7, 4
      %s98 = int_to_ptr.hbm [resolvable:$true] %s97
      %s99 = sshll.u32 [#allocation12], 4
      %s100 = int_to_ptr.vmem [resolvable:$true] %s99
      %105 = dma.hbm_to_vmem [thread:$0]  %s98, 1024, %s100, [#allocation13], 128, 128, 8
    $region33: #{tpu_custom_call.1} parent=1 // pred_fallthru
      _
    // Predicated region
    $region34: #{tpu_custom_call.1} parent=1 // pred_check
      _
    $region35: #{tpu_custom_call.1} parent=1 // pred_check_branch
      %107 = sbr.rel (0) target = $region37
    $region36: #{tpu_custom_call.1} parent=1 // pred_region
      %109 = vsyncadd [#allocation13], 0
      %s110 = sshll.u32 %s8, 4
      %s111 = int_to_ptr.hbm [resolvable:$true] %s110
      %s112 = sshll.u32 [#allocation14], 4
      %s113 = int_to_ptr.vmem [resolvable:$true] %s112
      %118 = dma.hbm_to_vmem [thread:$0]  %s111, 512, %s113, [#allocation13], 128, 128, 8
    $region37: #{tpu_custom_call.1} parent=1 // pred_fallthru
      _
    // Predicated region
    $region38: #{tpu_custom_call.1} parent=1 // pred_check
      _
    $region39: #{tpu_custom_call.1} parent=1 // pred_check_branch
      %120 = sbr.rel (0) target = $region41
    $region40: #{tpu_custom_call.1} parent=1 // pred_region
      _
    $region41: #{tpu_custom_call.1} parent=1 // pred_fallthru
      _
    // Predicated region
    $region42: #{tpu_custom_call.1} parent=1 // pred_check
      _
    $region43: #{tpu_custom_call.1} parent=1 // pred_check_branch
      %122 = sbr.rel (0) target = $region45
    $region44: #{tpu_custom_call.1} parent=1 // pred_region
      _
    $region45: #{tpu_custom_call.1} parent=1 // pred_fallthru
      _
    // Predicated region
    $region46: #{tpu_custom_call.1} parent=1 // pred_check
      _
    $region47: #{tpu_custom_call.1} parent=1 // pred_check_branch
      %124 = sbr.rel (0) target = $region49
    $region48: #{tpu_custom_call.1} parent=1 // pred_region
      _
    $region49: #{tpu_custom_call.1} parent=1 // pred_fallthru
      _
    // Predicated region
    $region50: #{tpu_custom_call.1} parent=1 // pred_check
      _
    $region51: #{tpu_custom_call.1} parent=1 // pred_check_branch
      %126 = sbr.rel (0) target = $region53
    $region52: #{tpu_custom_call.1} parent=1 // pred_region
      %128 = vsyncadd [#allocation16], 0
      %s129 = sshll.u32 %s12, 4
      %s130 = int_to_ptr.hbm [resolvable:$true] %s129
      %s131 = sshll.u32 [#allocation15], 4
      %s132 = int_to_ptr.vmem [resolvable:$true] %s131
      %137 = dma.hbm_to_vmem [thread:$0]  %s130, 512, %s132, [#allocation16], 128, 128, 8
    $region53: #{tpu_custom_call.1} parent=1 // pred_fallthru
      _
    // Predicated region
    $region54: #{tpu_custom_call.1} parent=1 // pred_check
      _
    $region55: #{tpu_custom_call.1} parent=1 // pred_check_branch
      %139 = sbr.rel (0) target = $region57
    $region56: #{tpu_custom_call.1} parent=1 // pred_region
      _
    $region57: #{tpu_custom_call.1} parent=1 // pred_fallthru
      _
    // Predicated region
    $region58: #{tpu_custom_call.1} parent=1 // pred_check
      _
    $region59: #{tpu_custom_call.1} parent=1 // pred_check_branch
      %141 = sbr.rel (0) target = $region61
    $region60: #{tpu_custom_call.1} parent=1 // pred_region
      %143 = dma.done [#allocation4], 32
    $region61: #{tpu_custom_call.1} parent=1 // pred_fallthru
      _
    // Predicated region
    $region62: #{tpu_custom_call.1} parent=1 // pred_check
      _
    $region63: #{tpu_custom_call.1} parent=1 // pred_check_branch
      %145 = sbr.rel (0) target = $region65
    $region64: #{tpu_custom_call.1} parent=1 // pred_region
      %147 = dma.done [#allocation7], 32
    $region65: #{tpu_custom_call.1} parent=1 // pred_fallthru
      _
    // Predicated region
    $region66: #{tpu_custom_call.1} parent=1 // pred_check
      _
    $region67: #{tpu_custom_call.1} parent=1 // pred_check_branch
      %149 = sbr.rel (0) target = $region69
    $region68: #{tpu_custom_call.1} parent=1 // pred_region
      %151 = dma.done [#allocation7], 256
    $region69: #{tpu_custom_call.1} parent=1 // pred_fallthru
      _
    // Predicated region
    $region70: #{tpu_custom_call.1} parent=1 // pred_check
      _
    $region71: #{tpu_custom_call.1} parent=1 // pred_check_branch
      %153 = sbr.rel (0) target = $region73
    $region72: #{tpu_custom_call.1} parent=1 // pred_region
      %155 = dma.done [#allocation10], 256
    $region73: #{tpu_custom_call.1} parent=1 // pred_fallthru
      _
    // Predicated region
    $region74: #{tpu_custom_call.1} parent=1 // pred_check
      _
    $region75: #{tpu_custom_call.1} parent=1 // pred_check_branch
      %157 = sbr.rel (0) target = $region77
    $region76: #{tpu_custom_call.1} parent=1 // pred_region
      %159 = dma.done [#allocation10], 512
    $region77: #{tpu_custom_call.1} parent=1 // pred_fallthru
      _
    // Predicated region
    $region78: #{tpu_custom_call.1} parent=1 // pred_check
      _
    $region79: #{tpu_custom_call.1} parent=1 // pred_check_branch
      %161 = sbr.rel (0) target = $region81
    $region80: #{tpu_custom_call.1} parent=1 // pred_region
      %163 = dma.done [#allocation13], 1024
    $region81: #{tpu_custom_call.1} parent=1 // pred_fallthru
      _
    // Predicated region
    $region82: #{tpu_custom_call.1} parent=1 // pred_check
      _
    $region83: #{tpu_custom_call.1} parent=1 // pred_check_branch
      %165 = sbr.rel (0) target = $region85
    $region84: #{tpu_custom_call.1} parent=1 // pred_region
      %167 = dma.done [#allocation13], 512
    $region85: #{tpu_custom_call.1} parent=1 // pred_fallthru
      _
    // Predicated region
    $region86: #{tpu_custom_call.1} parent=1 // pred_check
      _
    $region87: #{tpu_custom_call.1} parent=1 // pred_check_branch
      %169 = sbr.rel (0) target = $region89
    $region88: #{tpu_custom_call.1} parent=1 // pred_region
      %171 = dma.done [#allocation16], 512
    $region89: #{tpu_custom_call.1} parent=1 // pred_fallthru
      _
    %p172 = scmp.eq.s32.totalorder 0, 0
    // Predicated region
    $region90: #{tpu_custom_call.1} parent=1 // pred_check
      %p173 = pneg %p172
    $region91: #{tpu_custom_call.1} parent=1 // pred_check_branch
      %175 = sbr.rel (%p173) target = $region93
    $region92: #{tpu_custom_call.1} parent=1 // pred_region
      %v176 = vld [vmem:[#allocation6] sm:$0x3]
      %v177 = vld [vmem:[#allocation11] sm:$0xff]
      %v178 = vld [vmem:[#allocation11 + $0x8] sm:$0xff]
      %v179 = vld [vmem:[#allocation11 + $0x10] sm:$0xff]
      %v180 = vld [vmem:[#allocation11 + $0x18] sm:$0xff]
      %vm181 = vcmask 261120
      %v183 = vsel %vm181, %v176, 0
      %185 = vmatpush.msra.mxu0 0.0
      %186 = vmatpush.msra.mxu0 0.0
      %187 = vmatpush.msra.mxu0 0.0
      %188 = vmatpush.msra.mxu0 0.0
      %189 = vmatpush.msra.mxu0 0.0
      %190 = vmatpush.msra.mxu0 0.0
      %191 = vmatpush.msra.mxu0 0.0
      %192 = vmatpush.msra.mxu0 0.0
      %193 = vmatpush.msra.mxu0 0.0
      %194 = vmatpush.msra.mxu0 0.0
      %195 = vmatpush.msra.mxu0 0.0
      %196 = vmatpush.msra.mxu0 0.0
      %197 = vmatpush.msra.mxu0 %v180
      %198 = vmatpush.msra.mxu0 %v179
      %199 = vmatpush.msra.mxu0 %v178
      %200 = vmatpush.msra.mxu0 %v177
      %201 = vmatmul.f32.gmra.mxu0 %v183
      %v202 = vpop.f32.mrf.mxu0
      %v203 = vadd.f32 0.0, %v202
      %204 = vdwg.mxu0
      %v206 = vrot.slane %v203, 1
      %v207 = vld [vmem:[#allocation9] sm:$0xff]
      %v208 = vld [vmem:[#allocation9 + $0x8] sm:$0xff]
      %v209 = vperm.slane %v203, 0
      %v210 = vperm.slane %v206, 0
      %v213 = vadd.f32 %v209, %v207
      %v214 = vadd.f32 %v210, %v208
      %v215 = vtanh.pop %v213
      %v216 = vtanh.pop %v214
      %v217 = vld [vmem:[%s6] sm:$0x1]
      %v219 = vperm.slane %v217, 0
      %v221 = vmul.f32 %v215, %v219
      %v222 = vmul.f32 %v216, %v219
      %v223 = vsel %vm181, %v221, 0.0
      %224 = vadd.xlane.f32.xlu0 %v223
      %v225 = vpop.xlane.xlu0 %224
      %v226 = vsel %vm181, %v222, 0.0
      %227 = vadd.xlane.f32.xlu0 %v226
      %v228 = vpop.xlane.xlu0 %227
      %v229 = vld [vmem:[%s4] sm:$0x3]
      %vm230 = vcmp.gt.f32.partialorder %v229, 0.0
      %v233 = vlaneseq
      %v234 = vand.u32 %v233, 127
      %v235 = vperm.slane %v225, %v234
      %v236 = vperm.slane %v228, %v234
      %vm237 = vcmask 1041409
      %v238 = vsel %vm237, %v236, %v235
      %v240 = vsel %vm230, %v238, -1e+10
      %vm241 = vcmask 58368
      %v242 = vsel %vm241, %v240, -inf
      %243 = vmax.xlane.f32.xlu0 %v242
      %v244 = vpop.xlane.xlu0 %243
      %v245 = vsub.f32 %v240, %v244
      %v246 = vmul.f32 %v245, 1.442695
      %v247 = vpow.pop %v246
      %v248 = vsel %vm241, %v247, 0.0
      %249 = vadd.xlane.f32.xlu0 %v248
      %v250 = vpop.xlane.xlu0 %249
      %v251 = vrcp.pop %v250
      %v252 = vmul.f32 %v250, %v251
      %v253 = vsub.f32 1.0, %v252
      %v254 = vmul.f32 %v251, %v253
      %v255 = vadd.f32 %v251, %v254
      %vm256 = vweird.f32 %v250
      %vm257 = vweird.f32 %v251
      %vm258 = vmor %vm256, %vm257
      %v259 = vsel %vm258, %v251, %v255
      %v260 = vand.u32 2147483647, %v250
      %vm261 = vcmp.eq.f32.partialorder %v260, 8.507059e+37
      %v262 = vand.u32 %v250, 2147483648
      %v263 = vor.u32 1.1754944e-38, %v262
      %v264 = vsel %vm261, %v263, %v259
      %v265 = vmul.f32 %v247, %v264
      %v266 = vld [vmem:[#allocation8] sm:$0xff]
      %v267 = vld [vmem:[#allocation8 + $0x8] sm:$0xff]
      %v268 = vperm.slane %v265, 0
      %v269 = vlaneseq
      %v270 = vshrl.u32 %v269, 7
      %272 = vset.pattern.permute.xlu0 %v270
      %273 = vperm.xlu0 %272, %v268
      %v274 = vpop.permute.xlu0 %273
      %v275 = vperm.slane %v265, 1
      %v276 = vlaneseq
      %v277 = vshrl.u32 %v276, 7
      %279 = vset.pattern.permute.xlu0 %v277
      %280 = vperm.xlu0 %279, %v275
      %v281 = vpop.permute.xlu0 %280
      %v282 = vmul.f32 %v274, %v266
      %v283 = vmul.f32 %v281, %v267
      %v284 = vsel %vm181, %v282, 0.0
      %v285 = vrot.slane %v284, 4
      %v286 = vadd.f32 %v284, %v285
      %v287 = vrot.slane %v286, 2
      %v288 = vadd.f32 %v286, %v287
      %v289 = vrot.slane %v288, 1
      %v290 = vadd.f32 %v288, %v289
      %v291 = vsel %vm181, %v283, 0.0
      %v292 = vrot.slane %v291, 4
      %v293 = vadd.f32 %v291, %v292
      %v294 = vrot.slane %v293, 2
      %v295 = vadd.f32 %v293, %v294
      %v296 = vrot.slane %v295, 1
      %v297 = vadd.f32 %v295, %v296
      %v298 = vld [vmem:[#allocation3] sm:$0x3]
      %v299 = vld [vmem:[#allocation12] sm:$0xff]
      %v300 = vld [vmem:[#allocation12 + $0x8] sm:$0xff]
      %v301 = vld [vmem:[#allocation12 + $0x10] sm:$0xff]
      %v302 = vld [vmem:[#allocation12 + $0x18] sm:$0xff]
      %v303 = vld [vmem:[#allocation12 + $0x20] sm:$0xff]
      %v304 = vld [vmem:[#allocation12 + $0x28] sm:$0xff]
      %v305 = vld [vmem:[#allocation12 + $0x30] sm:$0xff]
      %v306 = vld [vmem:[#allocation12 + $0x38] sm:$0xff]
      %v307 = vld [vmem:[#allocation14] sm:$0xff]
      %v308 = vld [vmem:[#allocation14 + $0x8] sm:$0xff]
      %v309 = vld [vmem:[#allocation14 + $0x10] sm:$0xff]
      %v310 = vld [vmem:[#allocation14 + $0x18] sm:$0xff]
      %v313 = vsel %vm237, %v297, %v290
      %v314 = vsel %vm181, %v313, 0
      %316 = vmatpush.msra.mxu0 0.0
      %317 = vmatpush.msra.mxu0 0.0
      %318 = vmatpush.msra.mxu0 0.0
      %319 = vmatpush.msra.mxu0 0.0
      %320 = vmatpush.msra.mxu0 0.0
      %321 = vmatpush.msra.mxu0 0.0
      %322 = vmatpush.msra.mxu0 0.0
      %323 = vmatpush.msra.mxu0 0.0
      %324 = vmatpush.msra.mxu0 0.0
      %325 = vmatpush.msra.mxu0 0.0
      %326 = vmatpush.msra.mxu0 0.0
      %327 = vmatpush.msra.mxu0 0.0
      %328 = vmatpush.msra.mxu0 %v310
      %329 = vmatpush.msra.mxu0 %v309
      %330 = vmatpush.msra.mxu0 %v308
      %331 = vmatpush.msra.mxu0 %v307
      %332 = vmatmul.f32.gmra.mxu0 %v314
      %v333 = vpop.f32.mrf.mxu0
      %v334 = vadd.f32 0.0, %v333
      %335 = vdwg.mxu0
      %vm336 = vcmask 523264
      %v338 = vsel %vm336, %v298, 0
      %340 = vmatpush.msra.mxu0 0.0
      %341 = vmatpush.msra.mxu0 0.0
      %342 = vmatpush.msra.mxu0 0.0
      %343 = vmatpush.msra.mxu0 0.0
      %344 = vmatpush.msra.mxu0 0.0
      %345 = vmatpush.msra.mxu0 0.0
      %346 = vmatpush.msra.mxu0 0.0
      %347 = vmatpush.msra.mxu0 0.0
      %348 = vmatpush.msra.mxu0 %v306
      %349 = vmatpush.msra.mxu0 %v305
      %350 = vmatpush.msra.mxu0 %v304
      %351 = vmatpush.msra.mxu0 %v303
      %352 = vmatpush.msra.mxu0 %v302
      %353 = vmatpush.msra.mxu0 %v301
      %354 = vmatpush.msra.mxu0 %v300
      %355 = vmatpush.msra.mxu0 %v299
      %356 = vmatmul.f32.gmra.mxu0 %v338
      %v357 = vpop.f32.mrf.mxu0
      %v358 = vadd.f32 %v334, %v357
      %359 = vdwg.mxu0
      %360 = vrot.lane.b32.xlu0 %v203, 96
      %v361 = vpop.permute.xlu0 %360
      %v363 = vadd.f32 %v358, %v361
      %v364 = vld [vmem:[%s9] sm:$0x1]
      %v366 = vperm.slane %v364, 0
      %v368 = vadd.f32 %v363, %v366
      %v369 = vxor.u32 %v368, 2147483648
      %v370 = vmul.f32 %v369, 1.442695
      %v371 = vpow.pop %v370
      %v372 = vadd.f32 %v371, 1.0
      %v373 = vrcp.pop %v372
      %v374 = vmul.f32 %v372, %v373
      %v375 = vsub.f32 1.0, %v374
      %v376 = vmul.f32 %v373, %v375
      %v377 = vadd.f32 %v373, %v376
      %vm378 = vweird.f32 %v372
      %vm379 = vweird.f32 %v373
      %vm380 = vmor %vm378, %vm379
      %v381 = vsel %vm380, %v373, %v377
      %v382 = vand.u32 2147483647, %v372
      %vm383 = vcmp.eq.f32.partialorder %v382, 8.507059e+37
      %v384 = vand.u32 %v372, 2147483648
      %v385 = vor.u32 1.1754944e-38, %v384
      %v386 = vsel %vm383, %v385, %v381
      %v387 = vmul.f32 1.0, %v386
      %v388 = vld [vmem:[%s10] sm:$0x1]
      %v390 = vperm.slane %v388, 0
      %391 = vrot.lane.b32.xlu0 %v390, 64
      %v392 = vpop.permute.xlu0 %391
      %v394 = vadd.f32 %v358, %v392
      %v395 = vld [vmem:[%s11] sm:$0x1]
      %v397 = vperm.slane %v395, 0
      %398 = vrot.lane.b32.xlu0 %v397, 96
      %v399 = vpop.permute.xlu0 %398
      %v401 = vadd.f32 %v203, %v399
      %403 = vrot.lane.b32.xlu0 %v401, 32
      %v404 = vpop.permute.xlu0 %403
      %v406 = vmul.f32 %v387, %v404
      %408 = vrot.lane.b32.xlu0 %v406, 64
      %v409 = vpop.permute.xlu0 %408
      %v411 = vadd.f32 %v394, %v409
      %v412 = vtanh.pop %v411
      %v413 = vsub.f32 1.0, %v387
      %415 = vrot.lane.b32.xlu0 %v412, 96
      %v416 = vpop.permute.xlu0 %415
      %v418 = vmul.f32 %v413, %v416
      %419 = vrot.lane.b32.xlu0 %v176, 32
      %v420 = vpop.permute.xlu0 %419
      %v422 = vmul.f32 %v387, %v420
      %v423 = vadd.f32 %v418, %v422
      %425 = vrot.lane.b32.xlu0 %v423, 96
      %v426 = vpop.permute.xlu0 %425
      %vm428 = vcmask 254976
      %429 = vst.msk [vmem:[#allocation2] sm:$0x3] %vm428, %v426
      %431 = vrot.lane.b32.xlu0 %v265, 32
      %v432 = vpop.permute.xlu0 %431
      %v434 = vsel %vm181, %v426, %v432
      %vm435 = vcmask 326656
      %v436 = vsel %vm435, %v434, 0.0
      %437 = vst [vmem:[#allocation17] sm:$0x3] %v436
    $region93: #{tpu_custom_call.1} parent=1 // pred_fallthru
      _
    %v438 = vld [vmem:[#allocation2] sm:$0x3]
    %v439 = vld [vmem:[#allocation15] sm:$0xff]
    %v440 = vld [vmem:[#allocation15 + $0x8] sm:$0xff]
    %v441 = vld [vmem:[#allocation15 + $0x10] sm:$0xff]
    %v442 = vld [vmem:[#allocation15 + $0x18] sm:$0xff]
    %v443 = vld [vmem:[%s13] sm:$0x1]
    %v445 = vperm.slane %v443, 0
    %vm447 = vcmask 261120
    %v449 = vsel %vm447, %v438, 0
    %451 = vmatpush.msra.mxu0 0.0
    %452 = vmatpush.msra.mxu0 0.0
    %453 = vmatpush.msra.mxu0 0.0
    %454 = vmatpush.msra.mxu0 0.0
    %455 = vmatpush.msra.mxu0 0.0
    %456 = vmatpush.msra.mxu0 0.0
    %457 = vmatpush.msra.mxu0 0.0
    %458 = vmatpush.msra.mxu0 0.0
    %459 = vmatpush.msra.mxu0 0.0
    %460 = vmatpush.msra.mxu0 0.0
    %461 = vmatpush.msra.mxu0 0.0
    %462 = vmatpush.msra.mxu0 0.0
    %463 = vmatpush.msra.mxu0 %v442
    %464 = vmatpush.msra.mxu0 %v441
    %465 = vmatpush.msra.mxu0 %v440
    %466 = vmatpush.msra.mxu0 %v439
    %467 = vmatmul.f32.gmra.mxu0 %v449
    %v468 = vpop.f32.mrf.mxu0
    %v469 = vadd.f32 %v445, %v468
    %470 = vdwg.mxu0
    %471 = vst [vmem:[#allocation18] sm:$0x3] %v469
    // Predicated region
    $region94: #{tpu_custom_call.1} parent=1 // pred_check
      _
    $region95: #{tpu_custom_call.1} parent=1 // pred_check_branch
      %473 = sbr.rel (0) target = $region97
    $region96: #{tpu_custom_call.1} parent=1 // pred_region
      %475 = vsyncadd [#allocation5], 0
      %s477 = sshll.u32 [#allocation17], 4
      %s478 = int_to_ptr.vmem [resolvable:$true] %s477
      %s479 = sshll.u32 %s14, 4
      %s480 = int_to_ptr.hbm [resolvable:$true] %s479
      %482 = dma.vmem_to_hbm [thread:$0]  %s478, 32, %s480, [#allocation5]
    $region97: #{tpu_custom_call.1} parent=1 // pred_fallthru
      _
    // Predicated region
    $region98: #{tpu_custom_call.1} parent=1 // pred_check
      _
    $region99: #{tpu_custom_call.1} parent=1 // pred_check_branch
      %484 = sbr.rel (0) target = $region101
    $region100: #{tpu_custom_call.1} parent=1 // pred_region
      %486 = vsyncadd [#allocation19], 0
      %s488 = sshll.u32 [#allocation18], 4
      %s489 = int_to_ptr.vmem [resolvable:$true] %s488
      %s490 = sshll.u32 %s15, 4
      %s491 = int_to_ptr.hbm [resolvable:$true] %s490
      %493 = dma.vmem_to_hbm [thread:$0]  %s489, 32, %s491, [#allocation19]
    $region101: #{tpu_custom_call.1} parent=1 // pred_fallthru
      _
    // Predicated region
    $region102: #{tpu_custom_call.1} parent=1 // pred_check
      _
    $region103: #{tpu_custom_call.1} parent=1 // pred_check_branch
      %495 = sbr.rel (0) target = $region105
    $region104: #{tpu_custom_call.1} parent=1 // pred_region
      %497 = dma.done [#allocation5], 32
    $region105: #{tpu_custom_call.1} parent=1 // pred_fallthru
      _
    // Predicated region
    $region106: #{tpu_custom_call.1} parent=1 // pred_check
      _
    $region107: #{tpu_custom_call.1} parent=1 // pred_check_branch
      %499 = sbr.rel (0) target = $region109
    $region108: #{tpu_custom_call.1} parent=1 // pred_region
      %501 = dma.done [#allocation19], 32
    $region109: #{tpu_custom_call.1} parent=1 // pred_fallthru
      _
    %502 = vsyncpa [#allocation4], 1
    %503 = vsyncpa [#allocation7], 1
    %504 = vsyncpa [#allocation10], 1
    %505 = vsyncpa [#allocation13], 1
    %506 = vsyncpa [#allocation16], 1
    %507 = vsyncpa [#allocation5], 1
    %508 = vsyncpa [#allocation19], 1

</llo_original>
